<compile_context>
chip_gen: v6e
topology: v6e:2x2x1
jax: 0.10.0
libtpu: 0.0.40
codegen_flags: <defaults>
</compile_context>

<pallas_src>
import functools

import jax
import jax.numpy as jnp
from jax.experimental import pallas as pl
from jax.experimental.pallas import tpu as pltpu


def _round_up(x, m):
    return (x + m - 1) // m * m


def _make_cnn_kernel(TB, Lp, Fp):
    def cnn_kernel(x_ref, w_ref, b_ref, o_ref):
        # x_ref: (TB*Lp, CKp)  im2col rows for TB words (lane-dense, zero-padded K*C)
        # w_ref: (CKp, Fp)     im2col conv weights (resident across grid steps)
        # b_ref: (1, Fp)       conv bias (resident)
        # o_ref: (TB, Fp)      per-word outputs
        # Single fused MXU matmul over all K taps, f32 accumulation.
        acc = jnp.dot(x_ref[...], w_ref[...], preferred_element_type=jnp.float32)
        # (TB*Lp, Fp) -> (TB, Lp, Fp): Lp is a multiple of 8, so the split is
        # sublane-tile aligned (no relayout copies).
        y = acc.reshape(TB, Lp, Fp)
        # Max over time first (padded time rows are edge-duplicates of the last
        # valid row, so they never change the max), then bias + ReLU.
        m = jnp.max(y, axis=1)
        o_ref[...] = jnp.maximum(m + b_ref[...], 0.0)

    return cnn_kernel


@functools.partial(jax.jit, static_argnames=("padding",))
def cnn_forward(x, weight, bias, padding=1):
    """x: (B, char_embed_size, m_word)  NCL, like PyTorch.
    weight: (filter_num, char_embed_size, kernel_size), bias: (filter_num,)
    returns: (B, filter_num) float32
    """
    B, C, L = x.shape
    F_, _, K = weight.shape
    L_out = L + 2 * padding - K + 1

    # ---- wrapper glue: layout change, im2col, lane/sublane padding (plain XLA) ----
    x_nlc = jnp.transpose(x, (0, 2, 1)).astype(jnp.float32)         # (B, L, C)
    x_padt = jnp.pad(x_nlc, ((0, 0), (padding, padding), (0, 0)))   # (B, L+2p, C)
    # im2col: x_col[b, t, k*C + c] = x_padt[b, t+k, c]
    x_col = jnp.concatenate(
        [x_padt[:, k:k + L_out, :] for k in range(K)], axis=-1)     # (B, L_out, K*C)

    CK = K * C
    Lp = _round_up(L_out, 8)      # sublane-aligned time axis
    CKp = _round_up(CK, 128)      # lane-dense contraction dim
    Fp = _round_up(F_, 128)       # lane-dense output dim

    # Words per grid step: ~512 M-rows per tile, multiple of 8, avoid gross
    # over-padding at tiny batch sizes.  Block stays small (<1 MiB), safe for
    # v7x's 64 MiB VMEM as well as v5e/v6e.
    TB = max(8, min((512 // Lp) // 8 * 8, _round_up(B, 8)))
    Bp = _round_up(B, TB)

    # Time padding = edge copies (duplicates of the last valid row) -> the
    # in-kernel max over Lp is exact without any masking.
    x_col = jnp.pad(x_col, ((0, 0), (0, Lp - L_out), (0, 0)), mode="edge")
    # Batch padding + contraction padding = zeros (padded words are discarded;
    # zero contraction columns contribute nothing to the dot).
    x_col = jnp.pad(x_col, ((0, Bp - B), (0, 0), (0, CKp - CK)))
    x2d = x_col.reshape(Bp * Lp, CKp)

    # Weights: (F, C, K) -> (K, C, F) -> (K*C, F), zero-padded to (CKp, Fp).
    w_col = jnp.transpose(weight, (2, 1, 0)).reshape(CK, F_).astype(jnp.float32)
    w_pad = jnp.pad(w_col, ((0, CKp - CK), (0, Fp - F_)))
    b_pad = jnp.pad(bias.astype(jnp.float32), (0, Fp - F_)).reshape(1, Fp)
    # TODO(synk): for very large fused batches on v5e/v6e, stream x2d/w_pad in
    # bfloat16 (keep f32 accumulation) to halve HBM traffic.

    kernel = _make_cnn_kernel(TB, Lp, Fp)
    grid = (Bp // TB,)

    out = pl.pallas_call(
        kernel,
        out_shape=jax.ShapeDtypeStruct((Bp, Fp), jnp.float32),
        grid=grid,
        in_specs=[
            pl.BlockSpec((TB * Lp, CKp), lambda i: (i, 0)),  # streamed input tiles
            pl.BlockSpec((CKp, Fp), lambda i: (0, 0)),       # resident weights
            pl.BlockSpec((1, Fp), lambda i: (0, 0)),         # resident bias
        ],
        out_specs=pl.BlockSpec((TB, Fp), lambda i: (i, 0)),
        compiler_params=pltpu.CompilerParams(
            dimension_semantics=("parallel",),               # shardable across TCs (v7x)
        ),
    )(x2d, w_pad, b_pad)

    return out[:B, :F_]


def cnn_reference(x, weight, bias, padding=1):
    """Pure-JAX reference matching torch Conv1d -> ReLU -> MaxPool1d -> squeeze."""
    y = jax.lax.conv_general_dilated(
        x.astype(jnp.float32),
        weight.astype(jnp.float32),
        window_strides=(1,),
        padding=[(padding, padding)],
        dimension_numbers=("NCH", "OIH", "NCH"),
    )
    y = y + bias[None, :, None]
    y = jnp.maximum(y, 0.0)
    return jnp.max(y, axis=2)


if __name__ == "__main__":
    # Module hyperparameters (small, consistent with the forward pass).
    batch = 2
    char_embed_size = 8     # in_channels
    filter_num = 32         # out_channels (word_embed_size)
    m_word = 21
    kernel_size = 5
    padding_num = 1

    key = jax.random.PRNGKey(0)
    kx, kw, kb = jax.random.split(key, 3)

    x = jax.random.normal(kx, (batch, char_embed_size, m_word), dtype=jnp.float32)
    weight = jax.random.normal(
        kw, (filter_num, char_embed_size, kernel_size), dtype=jnp.float32
    ) * 0.1
    bias = jax.random.normal(kb, (filter_num,), dtype=jnp.float32) * 0.1

    out = cnn_forward(x, weight, bias, padding=padding_num)
    out = jax.block_until_ready(out)

    ref = cnn_reference(x, weight, bias, padding=padding_num)
    assert out.shape == (batch, filter_num), out.shape
    assert jnp.allclose(out, ref, atol=1e-4, rtol=1e-4), (
        float(jnp.max(jnp.abs(out - ref)))
    )

    # Exercise the multi-step grid path (word-axis tiling) at a modestly larger batch.
    kx2 = jax.random.fold_in(kx, 1)
    x2 = jax.random.normal(kx2, (20, char_embed_size, m_word), dtype=jnp.float32)
    out2 = jax.block_until_ready(cnn_forward(x2, weight, bias, padding=padding_num))
    ref2 = cnn_reference(x2, weight, bias, padding=padding_num)
    assert out2.shape == (20, filter_num), out2.shape
    assert jnp.allclose(out2, ref2, atol=1e-4, rtol=1e-4), (
        float(jnp.max(jnp.abs(out2 - ref2)))
    )

    print("KERNEL_OK")
</pallas_src>

<mosaic_0001>
module attributes {stable_mosaic.version = 11 : i64} {
  func.func @cnn_kernel(%arg0: i32, %arg1: memref<192x128xf32, #tpu.memory_space<vmem>>, %arg2: memref<128x128xf32, #tpu.memory_space<vmem>>, %arg3: memref<1x128xf32, #tpu.memory_space<vmem>>, %arg4: memref<8x128xf32, #tpu.memory_space<vmem>>) attributes {dimension_semantics = [#tpu.dimension_semantics<parallel>], iteration_bounds = array<i64: 1>, scalar_prefetch = 0 : i64, scratch_operands = 0 : i64, tpu.core_type = #tpu.core_type<tc>, window_params = [{transform_indices = @transform_0, window_bounds = array<i64: 192, 128>}, {pipeline_mode = #tpu.pipeline_mode<synchronous>, transform_indices = @transform_1, window_bounds = array<i64: 128, 128>}, {pipeline_mode = #tpu.pipeline_mode<synchronous>, transform_indices = @transform_2, window_bounds = array<i64: 1, 128>}, {transform_indices = @transform_3, window_bounds = array<i64: 8, 128>}]} {
    %c0 = arith.constant 0 : index
    %c0_0 = arith.constant 0 : index
    %0 = vector.load %arg1[%c0, %c0_0] : memref<192x128xf32, #tpu.memory_space<vmem>>, vector<192x128xf32>
    %c0_1 = arith.constant 0 : index
    %c0_2 = arith.constant 0 : index
    %1 = vector.load %arg2[%c0_1, %c0_2] : memref<128x128xf32, #tpu.memory_space<vmem>>, vector<128x128xf32>
    %cst = arith.constant dense<0.000000e+00> : vector<192x128xf32>
    %2 = tpu.matmul %0, %1, %cst {dimension_numbers = #tpu.dot_dimension_numbers<[1], [0], [0], [1], [0, 0, 1, 1], [], []>} : vector<192x128xf32>, vector<128x128xf32>, vector<192x128xf32> -> vector<192x128xf32>
    %3 = vector.shape_cast %2 : vector<192x128xf32> to vector<8x24x128xf32>
    %cst_3 = arith.constant dense<0xFF800000> : vector<8x128xf32>
    %4 = vector.multi_reduction <maximumf>, %3, %cst_3 [1] : vector<8x24x128xf32> to vector<8x128xf32>
    %c0_4 = arith.constant 0 : index
    %c0_5 = arith.constant 0 : index
    %5 = vector.load %arg3[%c0_4, %c0_5] : memref<1x128xf32, #tpu.memory_space<vmem>>, vector<1x128xf32>
    %6 = vector.broadcast %5 : vector<1x128xf32> to vector<8x128xf32>
    %7 = arith.addf %4, %6 : vector<8x128xf32>
    %cst_6 = arith.constant 0.000000e+00 : f32
    %8 = vector.broadcast %cst_6 : f32 to vector<8x128xf32>
    %9 = arith.maximumf %7, %8 : vector<8x128xf32>
    %c0_7 = arith.constant 0 : index
    %c0_8 = arith.constant 0 : index
    %10 = vector.load %arg4[%c0_7, %c0_8] : memref<8x128xf32, #tpu.memory_space<vmem>>, vector<8x128xf32>
    tpu.vector_store %arg4[%c0_7, %c0_8], %9 {strides = array<i32>} : memref<8x128xf32, #tpu.memory_space<vmem>>, vector<8x128xf32>,
    return
  }
  func.func @transform_0(%arg0: i32) -> (i32, i32) {
    %c0_i32 = arith.constant 0 : i32
    %c0_i32_0 = arith.constant 0 : i32
    return %arg0, %c0_i32 : i32, i32
  }
  func.func @transform_1(%arg0: i32) -> (i32, i32) {
    %c0_i32 = arith.constant 0 : i32
    %c0_i32_0 = arith.constant 0 : i32
    %c0_i32_1 = arith.constant 0 : i32
    return %c0_i32, %c0_i32_0 : i32, i32
  }
  func.func @transform_2(%arg0: i32) -> (i32, i32) {
    %c0_i32 = arith.constant 0 : i32
    %c0_i32_0 = arith.constant 0 : i32
    %c0_i32_1 = arith.constant 0 : i32
    return %c0_i32, %c0_i32_0 : i32, i32
  }
  func.func @transform_3(%arg0: i32) -> (i32, i32) {
    %c0_i32 = arith.constant 0 : i32
    %c0_i32_0 = arith.constant 0 : i32
    return %arg0, %c0_i32 : i32, i32
  }
}

</mosaic_0001>

<llo_original>
// kernel: cnn_forward.1
$region0: #{cnn_forward.1}
  #allocation0 [shape = 'u32[]', space=smem, size = 0x4, offset = 0x4, fixed_abs, tag = 'smem constant byte address 0x4 - core index']
  #allocation1 [shape = 'u32[144,128]{1,0:T(1,128)}', space=vmem, size = 0x12000, scoped, tag = 'internal scratch']
  %s0 = inlined_call_operand.vmem [shape: f32[192,128], index: 0, kind: input, shape index: {}]
  %s1 = inlined_call_operand.vmem [shape: f32[128,128], index: 1, kind: input, shape index: {}]
  %s2 = inlined_call_operand.vmem [shape: f32[1,128], index: 2, kind: input, shape index: {}]
  %s3 = inlined_call_operand.vmem [shape: f32[8,128], index: 3, kind: output, shape index: {}]
  %s4 = sld [smem:[#allocation0]]
  $region22: #{cnn_forward.1} parent=0
    _
  %s6 = ssub.s32 1, %s4
  %s7 = scalar_select 0, %s6, %s4
  // Predicated region
  $region2: #{cnn_forward.1} parent=0 // pred_check
    _
  $region3: #{cnn_forward.1} parent=0 // pred_check_branch
    %9 = sbr.rel (0) target = $region5
  $region4: #{cnn_forward.1} parent=0 // pred_region
    _
  $region5: #{cnn_forward.1} parent=0 // pred_fallthru
    _
  // Predicated region
  $region6: #{cnn_forward.1} parent=0 // pred_check
    _
  $region7: #{cnn_forward.1} parent=0 // pred_check_branch
    %11 = sbr.rel (0) target = $region9
  $region8: #{cnn_forward.1} parent=0 // pred_region
    _
  $region9: #{cnn_forward.1} parent=0 // pred_fallthru
    _
  // Predicated region
  $region10: #{cnn_forward.1} parent=0 // pred_check
    _
  $region11: #{cnn_forward.1} parent=0 // pred_check_branch
    %13 = sbr.rel (0) target = $region13
  $region12: #{cnn_forward.1} parent=0 // pred_region
    _
  $region13: #{cnn_forward.1} parent=0 // pred_fallthru
    _
  %v14 = vld [vmem:[%s0] sm:$0xff]
  %v15 = vld [vmem:[%s0 + $0x8] sm:$0xff]
  %v16 = vld [vmem:[%s0 + $0x10] sm:$0xff]
  %v17 = vld [vmem:[%s0 + $0x18] sm:$0xff]
  %v18 = vld [vmem:[%s0 + $0x20] sm:$0xff]
  %v19 = vld [vmem:[%s0 + $0x28] sm:$0xff]
  %v20 = vld [vmem:[%s0 + $0x30] sm:$0xff]
  %v21 = vld [vmem:[%s0 + $0x38] sm:$0xff]
  %v22 = vld [vmem:[%s0 + $0x40] sm:$0xff]
  %v23 = vld [vmem:[%s0 + $0x48] sm:$0xff]
  %v24 = vld [vmem:[%s0 + $0x50] sm:$0xff]
  %v25 = vld [vmem:[%s0 + $0x58] sm:$0xff]
  %v26 = vld [vmem:[%s0 + $0x60] sm:$0xff]
  %v27 = vld [vmem:[%s0 + $0x68] sm:$0xff]
  %v28 = vld [vmem:[%s0 + $0x70] sm:$0xff]
  %v29 = vld [vmem:[%s0 + $0x78] sm:$0xff]
  %v30 = vld [vmem:[%s0 + $0x80] sm:$0xff]
  %v31 = vld [vmem:[%s0 + $0x88] sm:$0xff]
  %v32 = vld [vmem:[%s0 + $0x90] sm:$0xff]
  %v33 = vld [vmem:[%s0 + $0x98] sm:$0xff]
  %v34 = vld [vmem:[%s0 + $0xa0] sm:$0xff]
  %v35 = vld [vmem:[%s0 + $0xa8] sm:$0xff]
  %v36 = vld [vmem:[%s0 + $0xb0] sm:$0xff]
  %v37 = vld [vmem:[%s0 + $0xb8] sm:$0xff]
  %v38 = vld [vmem:[%s1] sm:$0xff]
  %v39 = vld [vmem:[%s1 + $0x8] sm:$0xff]
  %v40 = vld [vmem:[%s1 + $0x10] sm:$0xff]
  %v41 = vld [vmem:[%s1 + $0x18] sm:$0xff]
  %v42 = vld [vmem:[%s1 + $0x20] sm:$0xff]
  %v43 = vld [vmem:[%s1 + $0x28] sm:$0xff]
  %v44 = vld [vmem:[%s1 + $0x30] sm:$0xff]
  %v45 = vld [vmem:[%s1 + $0x38] sm:$0xff]
  %v46 = vld [vmem:[%s1 + $0x40] sm:$0xff]
  %v47 = vld [vmem:[%s1 + $0x48] sm:$0xff]
  %v48 = vld [vmem:[%s1 + $0x50] sm:$0xff]
  %v49 = vld [vmem:[%s1 + $0x58] sm:$0xff]
  %v50 = vld [vmem:[%s1 + $0x60] sm:$0xff]
  %v51 = vld [vmem:[%s1 + $0x68] sm:$0xff]
  %v52 = vld [vmem:[%s1 + $0x70] sm:$0xff]
  %v53 = vld [vmem:[%s1 + $0x78] sm:$0xff]
  %54 = vmatprep.subr.mxu0 0.0
  %55 = vmatpush1.msra.mxu0 %v53
  %56 = vmatprep.subr.mxu0 0.0
  %57 = vmatpush1.msra.mxu0 %v52
  %58 = vmatprep.subr.mxu0 0.0
  %59 = vmatpush1.msra.mxu0 %v51
  %60 = vmatprep.subr.mxu0 0.0
  %61 = vmatpush1.msra.mxu0 %v50
  %62 = vmatprep.subr.mxu0 0.0
  %63 = vmatpush1.msra.mxu0 %v49
  %64 = vmatprep.subr.mxu0 0.0
  %65 = vmatpush1.msra.mxu0 %v48
  %66 = vmatprep.subr.mxu0 0.0
  %67 = vmatpush1.msra.mxu0 %v47
  %68 = vmatprep.subr.mxu0 0.0
  %69 = vmatpush1.msra.mxu0 %v46
  %70 = vmatprep.subr.mxu0 0.0
  %71 = vmatpush1.msra.mxu0 %v45
  %72 = vmatprep.subr.mxu0 0.0
  %73 = vmatpush1.msra.mxu0 %v44
  %74 = vmatprep.subr.mxu0 0.0
  %75 = vmatpush1.msra.mxu0 %v43
  %76 = vmatprep.subr.mxu0 0.0
  %77 = vmatpush1.msra.mxu0 %v42
  %78 = vmatprep.subr.mxu0 0.0
  %79 = vmatpush1.msra.mxu0 %v41
  %80 = vmatprep.subr.mxu0 0.0
  %81 = vmatpush1.msra.mxu0 %v40
  %82 = vmatprep.subr.mxu0 0.0
  %83 = vmatpush1.msra.mxu0 %v39
  %84 = vmatprep.subr.mxu0 0.0
  %85 = vmatpush1.msra.mxu0 %v38
  %86 = vmatprep.subr.mxu0 0.0
  %87 = vmatpush2.msra.mxu0 0.0
  %88 = vmatprep.subr.mxu0 0.0
  %89 = vmatpush2.msra.mxu0 0.0
  %90 = vmatprep.subr.mxu0 0.0
  %91 = vmatpush2.msra.mxu0 0.0
  %92 = vmatprep.subr.mxu0 0.0
  %93 = vmatpush2.msra.mxu0 0.0
  %94 = vmatprep.subr.mxu0 0.0
  %95 = vmatpush2.msra.mxu0 0.0
  %96 = vmatprep.subr.mxu0 0.0
  %97 = vmatpush2.msra.mxu0 0.0
  %98 = vmatprep.subr.mxu0 0.0
  %99 = vmatpush2.msra.mxu0 0.0
  %100 = vmatprep.subr.mxu0 0.0
  %101 = vmatpush2.msra.mxu0 0.0
  %102 = vmatprep.subr.mxu0 0.0
  %103 = vmatpush2.msra.mxu0 0.0
  %104 = vmatprep.subr.mxu0 0.0
  %105 = vmatpush2.msra.mxu0 0.0
  %106 = vmatprep.subr.mxu0 0.0
  %107 = vmatpush2.msra.mxu0 0.0
  %108 = vmatprep.subr.mxu0 0.0
  %109 = vmatpush2.msra.mxu0 0.0
  %110 = vmatprep.subr.mxu0 0.0
  %111 = vmatpush2.msra.mxu0 0.0
  %112 = vmatprep.subr.mxu0 0.0
  %113 = vmatpush2.msra.mxu0 0.0
  %114 = vmatprep.subr.mxu0 0.0
  %115 = vmatpush2.msra.mxu0 0.0
  %116 = vmatprep.subr.mxu0 0.0
  %117 = vmatpush2.msra.mxu0 0.0
  %118 = vmatprep.mubr.f32.mxu0 0.0
  %119 = vmatmul.mubr.f32.gmra.mxu0 %v14
  %v120 = vpop.f32.mrf.mxu0
  %v121 = vadd.f32 0.0, %v120
  %v122 = vpop.f32.mrf.mxu0
  %123 = vmatprep.mubr.f32.mxu0 0.0
  %124 = vmatmul.mubr.f32.gmra.mxu0 %v15
  %v125 = vpop.f32.mrf.mxu0
  %v126 = vadd.f32 0.0, %v125
  %v127 = vpop.f32.mrf.mxu0
  %128 = vmatprep.mubr.f32.mxu0 0.0
  %129 = vmatmul.mubr.f32.gmra.mxu0 %v16
  %v130 = vpop.f32.mrf.mxu0
  %v131 = vadd.f32 0.0, %v130
  %v132 = vpop.f32.mrf.mxu0
  %133 = vmatprep.mubr.f32.mxu0 0.0
  %134 = vmatmul.mubr.f32.gmra.mxu0 %v17
  %v135 = vpop.f32.mrf.mxu0
  %v136 = vadd.f32 0.0, %v135
  %v137 = vpop.f32.mrf.mxu0
  %138 = vmatprep.mubr.f32.mxu0 0.0
  %139 = vmatmul.mubr.f32.gmra.mxu0 %v18
  %v140 = vpop.f32.mrf.mxu0
  %v141 = vadd.f32 0.0, %v140
  %v142 = vpop.f32.mrf.mxu0
  %143 = vmatprep.mubr.f32.mxu0 0.0
  %144 = vmatmul.mubr.f32.gmra.mxu0 %v19
  %v145 = vpop.f32.mrf.mxu0
  %v146 = vadd.f32 0.0, %v145
  %v147 = vpop.f32.mrf.mxu0
  %148 = vmatprep.mubr.f32.mxu0 0.0
  %149 = vmatmul.mubr.f32.gmra.mxu0 %v20
  %v150 = vpop.f32.mrf.mxu0
  %v151 = vadd.f32 0.0, %v150
  %v152 = vpop.f32.mrf.mxu0
  %153 = vmatprep.mubr.f32.mxu0 0.0
  %154 = vmatmul.mubr.f32.gmra.mxu0 %v21
  %v155 = vpop.f32.mrf.mxu0
  %v156 = vadd.f32 0.0, %v155
  %v157 = vpop.f32.mrf.mxu0
  %158 = vmatprep.mubr.f32.mxu0 0.0
  %159 = vmatmul.mubr.f32.gmra.mxu0 %v22
  %v160 = vpop.f32.mrf.mxu0
  %v161 = vadd.f32 0.0, %v160
  %v162 = vpop.f32.mrf.mxu0
  %163 = vmatprep.mubr.f32.mxu0 0.0
  %164 = vmatmul.mubr.f32.gmra.mxu0 %v23
  %v165 = vpop.f32.mrf.mxu0
  %v166 = vadd.f32 0.0, %v165
  %v167 = vpop.f32.mrf.mxu0
  %168 = vmatprep.mubr.f32.mxu0 0.0
  %169 = vmatmul.mubr.f32.gmra.mxu0 %v24
  %v170 = vpop.f32.mrf.mxu0
  %v171 = vadd.f32 0.0, %v170
  %v172 = vpop.f32.mrf.mxu0
  %173 = vmatprep.mubr.f32.mxu0 0.0
  %174 = vmatmul.mubr.f32.gmra.mxu0 %v25
  %v175 = vpop.f32.mrf.mxu0
  %v176 = vadd.f32 0.0, %v175
  %v177 = vpop.f32.mrf.mxu0
  %178 = vmatprep.mubr.f32.mxu0 0.0
  %179 = vmatmul.mubr.f32.gmra.mxu0 %v26
  %v180 = vpop.f32.mrf.mxu0
  %v181 = vadd.f32 0.0, %v180
  %v182 = vpop.f32.mrf.mxu0
  %183 = vmatprep.mubr.f32.mxu0 0.0
  %184 = vmatmul.mubr.f32.gmra.mxu0 %v27
  %v185 = vpop.f32.mrf.mxu0
  %v186 = vadd.f32 0.0, %v185
  %v187 = vpop.f32.mrf.mxu0
  %188 = vmatprep.mubr.f32.mxu0 0.0
  %189 = vmatmul.mubr.f32.gmra.mxu0 %v28
  %v190 = vpop.f32.mrf.mxu0
  %v191 = vadd.f32 0.0, %v190
  %v192 = vpop.f32.mrf.mxu0
  %193 = vmatprep.mubr.f32.mxu0 0.0
  %194 = vmatmul.mubr.f32.gmra.mxu0 %v29
  %v195 = vpop.f32.mrf.mxu0
  %v196 = vadd.f32 0.0, %v195
  %v197 = vpop.f32.mrf.mxu0
  %198 = vmatprep.mubr.f32.mxu0 0.0
  %199 = vmatmul.mubr.f32.gmra.mxu0 %v30
  %v200 = vpop.f32.mrf.mxu0
  %v201 = vadd.f32 0.0, %v200
  %v202 = vpop.f32.mrf.mxu0
  %203 = vmatprep.mubr.f32.mxu0 0.0
  %204 = vmatmul.mubr.f32.gmra.mxu0 %v31
  %v205 = vpop.f32.mrf.mxu0
  %v206 = vadd.f32 0.0, %v205
  %v207 = vpop.f32.mrf.mxu0
  %208 = vmatprep.mubr.f32.mxu0 0.0
  %209 = vmatmul.mubr.f32.gmra.mxu0 %v32
  %v210 = vpop.f32.mrf.mxu0
  %v211 = vadd.f32 0.0, %v210
  %v212 = vpop.f32.mrf.mxu0
  %213 = vmatprep.mubr.f32.mxu0 0.0
  %214 = vmatmul.mubr.f32.gmra.mxu0 %v33
  %v215 = vpop.f32.mrf.mxu0
  %v216 = vadd.f32 0.0, %v215
  %v217 = vpop.f32.mrf.mxu0
  %218 = vmatprep.mubr.f32.mxu0 0.0
  %219 = vmatmul.mubr.f32.gmra.mxu0 %v34
  %v220 = vpop.f32.mrf.mxu0
  %v221 = vadd.f32 0.0, %v220
  %v222 = vpop.f32.mrf.mxu0
  %223 = vmatprep.mubr.f32.mxu0 0.0
  %224 = vmatmul.mubr.f32.gmra.mxu0 %v35
  %v225 = vpop.f32.mrf.mxu0
  %v226 = vadd.f32 0.0, %v225
  %v227 = vpop.f32.mrf.mxu0
  %228 = vmatprep.mubr.f32.mxu0 0.0
  %229 = vmatmul.mubr.f32.gmra.mxu0 %v36
  %v230 = vpop.f32.mrf.mxu0
  %v231 = vadd.f32 0.0, %v230
  %v232 = vpop.f32.mrf.mxu0
  %233 = vmatprep.mubr.f32.mxu0 0.0
  %234 = vmatmul.mubr.f32.gmra.mxu0 %v37
  %v235 = vpop.f32.mrf.mxu0
  %v236 = vadd.f32 0.0, %v235
  %v237 = vpop.f32.mrf.mxu0
  %238 = vdwg.mxu0
  %v239 = vmax.f32 %v121, %v126
  %v240 = vmax.f32 %v239, %v131
  %v241 = vrot.slane %v240, 4
  %v242 = vmax.f32 %v240, %v241
  %v243 = vrot.slane %v242, 2
  %v244 = vmax.f32 %v242, %v243
  %v245 = vrot.slane %v244, 1
  %v246 = vmax.f32 %v244, %v245
  %v247 = vmax.f32 %v136, %v141
  %v248 = vmax.f32 %v247, %v146
  %v249 = vrot.slane %v248, 4
  %v250 = vmax.f32 %v248, %v249
  %v251 = vrot.slane %v250, 2
  %v252 = vmax.f32 %v250, %v251
  %v253 = vrot.slane %v252, 1
  %v254 = vmax.f32 %v252, %v253
  %v255 = vmax.f32 %v151, %v156
  %v256 = vmax.f32 %v255, %v161
  %v257 = vrot.slane %v256, 4
  %v258 = vmax.f32 %v256, %v257
  %v259 = vrot.slane %v258, 2
  %v260 = vmax.f32 %v258, %v259
  %v261 = vrot.slane %v260, 1
  %v262 = vmax.f32 %v260, %v261
  %v263 = vmax.f32 %v166, %v171
  %v264 = vmax.f32 %v263, %v176
  %v265 = vrot.slane %v264, 4
  %v266 = vmax.f32 %v264, %v265
  %v267 = vrot.slane %v266, 2
  %v268 = vmax.f32 %v266, %v267
  %v269 = vrot.slane %v268, 1
  %v270 = vmax.f32 %v268, %v269
  %v271 = vmax.f32 %v181, %v186
  %v272 = vmax.f32 %v271, %v191
  %v273 = vrot.slane %v272, 4
  %v274 = vmax.f32 %v272, %v273
  %v275 = vrot.slane %v274, 2
  %v276 = vmax.f32 %v274, %v275
  %v277 = vrot.slane %v276, 1
  %v278 = vmax.f32 %v276, %v277
  %v279 = vmax.f32 %v196, %v201
  %v280 = vmax.f32 %v279, %v206
  %v281 = vrot.slane %v280, 4
  %v282 = vmax.f32 %v280, %v281
  %v283 = vrot.slane %v282, 2
  %v284 = vmax.f32 %v282, %v283
  %v285 = vrot.slane %v284, 1
  %v286 = vmax.f32 %v284, %v285
  %v287 = vmax.f32 %v211, %v216
  %v288 = vmax.f32 %v287, %v221
  %v289 = vrot.slane %v288, 4
  %v290 = vmax.f32 %v288, %v289
  %v291 = vrot.slane %v290, 2
  %v292 = vmax.f32 %v290, %v291
  %v293 = vrot.slane %v292, 1
  %v294 = vmax.f32 %v292, %v293
  %v295 = vmax.f32 %v226, %v231
  %v296 = vmax.f32 %v295, %v236
  %v297 = vrot.slane %v296, 4
  %v298 = vmax.f32 %v296, %v297
  %v299 = vrot.slane %v298, 2
  %v300 = vmax.f32 %v298, %v299
  %v301 = vrot.slane %v300, 1
  %v302 = vmax.f32 %v300, %v301
  %v303 = vld [vmem:[%s2] sm:$0x1]
  %v305 = vlaneseq
  %v306 = vshrl.u32 %v305, 7
  %v307 = vsub.s32 0, %v306
  %v308 = vrot.slane %v303, %v307
  %v310 = vadd.f32 %v246, %v308
  %v311 = vadd.f32 %v254, %v308
  %v312 = vadd.f32 %v262, %v308
  %v313 = vadd.f32 %v270, %v308
  %v314 = vadd.f32 %v278, %v308
  %v315 = vadd.f32 %v286, %v308
  %v316 = vadd.f32 %v294, %v308
  %v317 = vadd.f32 %v302, %v308
  %v318 = vmax.f32 %v310, 0.0
  %v319 = vmax.f32 %v311, 0.0
  %v320 = vmax.f32 %v312, 0.0
  %v321 = vmax.f32 %v313, 0.0
  %v322 = vmax.f32 %v314, 0.0
  %v323 = vmax.f32 %v315, 0.0
  %v324 = vmax.f32 %v316, 0.0
  %v325 = vmax.f32 %v317, 0.0
  %v334 = vrot.slane %v319, 7
  %vm335 = vcmask 1041409
  %v336 = vsel %vm335, %v334, %v318
  %v337 = vrot.slane %v320, 6
  %vm338 = vcmask 1042434
  %v339 = vsel %vm338, %v337, %v336
  %v340 = vrot.slane %v321, 5
  %vm341 = vcmask 1043459
  %v342 = vsel %vm341, %v340, %v339
  %v343 = vrot.slane %v322, 4
  %vm344 = vcmask 1044484
  %v345 = vsel %vm344, %v343, %v342
  %v346 = vrot.slane %v323, 3
  %vm347 = vcmask 1045509
  %v348 = vsel %vm347, %v346, %v345
  %v349 = vrot.slane %v324, 2
  %vm350 = vcmask 1046534
  %v351 = vsel %vm350, %v349, %v348
  %v352 = vrot.slane %v325, 1
  %vm353 = vcmask 1047559
  %v354 = vsel %vm353, %v352, %v351
  %356 = vst [vmem:[%s3] sm:$0xff] %v354
  // Predicated region
  $region14: #{cnn_forward.1} parent=0 // pred_check
    _
  $region15: #{cnn_forward.1} parent=0 // pred_check_branch
    %358 = sbr.rel (0) target = $region17
  $region16: #{cnn_forward.1} parent=0 // pred_region
    _
  $region17: #{cnn_forward.1} parent=0 // pred_fallthru
    _
  // Predicated region
  $region18: #{cnn_forward.1} parent=0 // pred_check
    _
  $region19: #{cnn_forward.1} parent=0 // pred_check_branch
    %360 = sbr.rel (0) target = $region21
  $region20: #{cnn_forward.1} parent=0 // pred_region
    _
  $region21: #{cnn_forward.1} parent=0 // pred_fallthru
    _

</llo_original>
